<compile_context>
chip_gen: v5e
topology: v5e:2x2
jax: 0.10.0
libtpu: 0.0.40
codegen_flags: <defaults>
</compile_context>

<pallas_src>
import jax
import jax.numpy as jnp
from jax.experimental import pallas as pl
from jax.experimental.pallas import tpu as pltpu


_LANE = 128       # vreg lane width
_MAX_ROWS = 64    # max 128-wide spatial rows per block -> 8192 elems/channel


def _round_up(x, m):
    return (x + m - 1) // m * m


def _stnet_kernel(x_ref, w_ref, b_ref, o_ref):
    """1x1-conv channel mix + bias + tanh on one (C, S, 128) spatial block.

    x_ref: (Cin,  S, 128)  VMEM   (spatial on lanes -> dense tiles)
    w_ref: (Cout, Cin)     SMEM   (PyTorch Conv2d weight, k=1 squeezed)
    b_ref: (Cout,)         SMEM
    o_ref: (Cout, S, 128)  VMEM
    """
    cout, cin = w_ref.shape
    # Tiny channel counts: unrolled VPU multiply-adds with scalar weights
    # broadcast from SMEM over lane-dense spatial vregs.
    # TODO(synk): for cin/cout >= ~64 switch to an MXU jnp.dot path with
    # 128-aligned channel tiles instead of the unrolled VPU loop.
    for co in range(cout):
        acc = x_ref[0] * w_ref[co, 0]
        for ci in range(1, cin):
            acc = acc + x_ref[ci] * w_ref[co, ci]
        o_ref[co] = jnp.tanh(acc + b_ref[co]).astype(o_ref.dtype)


def _stnet_pallas(x4, w, b, *, rows_per_block):
    n, cin, r_pad, lane = x4.shape
    cout = w.shape[0]
    grid = (n, r_pad // rows_per_block)
    return pl.pallas_call(
        _stnet_kernel,
        out_shape=jax.ShapeDtypeStruct((n, cout, r_pad, lane), x4.dtype),
        grid=grid,
        in_specs=[
            pl.BlockSpec((None, cin, rows_per_block, lane),
                         lambda i, j: (i, 0, j, 0)),
            pl.BlockSpec(memory_space=pltpu.MemorySpace.SMEM),   # weight
            pl.BlockSpec(memory_space=pltpu.MemorySpace.SMEM),   # bias
        ],
        out_specs=pl.BlockSpec((None, cout, rows_per_block, lane),
                               lambda i, j: (i, 0, j, 0)),
        compiler_params=pltpu.CompilerParams(
            dimension_semantics=("parallel", "parallel"),
            vmem_limit_bytes=32 * 1024 * 1024,
        ),
    )(x4, w, b)


class ODEFunc:
    """JAX/Pallas port of baselines/MSTE/arch/components/st_block.py::ODEFunc."""

    def __init__(self, channels, key):
        kw, kb = jax.random.split(key)
        bound = 1.0 / (channels ** 0.5)
        # PyTorch Conv2d(C, C, 1) weight is (Cout, Cin, 1, 1); store (Cout, Cin).
        self.w = jax.random.uniform(kw, (channels, channels), jnp.float32,
                                    -bound, bound)
        self.b = jax.random.uniform(kb, (channels,), jnp.float32, -bound, bound)
        self.nfe = 0

    def __call__(self, t, x):
        # t is unused, exactly as in the PyTorch module.
        self.nfe += 1
        n, c, h, w = x.shape
        hw = h * w

        # Put the spatial axis on lanes: (N, C, HW) -> (N, C, R, 128), R=HW/128.
        r = -(-hw // _LANE)                       # ceil(hw / 128)
        if r <= _MAX_ROWS:
            rows_per_block = r                    # whole spatial extent per step
            r_pad = r
        else:
            rows_per_block = _MAX_ROWS            # multiple of 8 -> dense tiles
            r_pad = _round_up(r, rows_per_block)
        hw_pad = r_pad * _LANE

        x3 = x.reshape(n, c, hw)
        if hw_pad != hw:                          # pad only when needed
            x3 = jnp.pad(x3, ((0, 0), (0, 0), (0, hw_pad - hw)))
        x4 = x3.reshape(n, c, r_pad, _LANE)       # free, contiguous reshape

        y4 = _stnet_pallas(x4, self.w, self.b, rows_per_block=rows_per_block)

        y = y4.reshape(n, c, hw_pad)[:, :, :hw].reshape(n, c, h, w)
        return y


def _reference(x, w, b):
    # y[n,co,h,w] = tanh( sum_ci w[co,ci] * x[n,ci,h,w] + b[co] )
    y = jnp.einsum("oc,nchw->nohw", w, x) + b[None, :, None, None]
    return jnp.tanh(y)


if __name__ == "__main__":
    key = jax.random.PRNGKey(0)
    k_x, k_p = jax.random.split(key)

    N, C, H, W = 2, 4, 16, 16          # NCHW, consistent with a Conv2d stnet
    x = jax.random.normal(k_x, (N, C, H, W), jnp.float32)
    t = jnp.float32(0.0)               # unused, mirrors the PyTorch signature

    ode_func = ODEFunc(C, k_p)
    out = jax.block_until_ready(ode_func(t, x))

    ref = _reference(x, ode_func.w, ode_func.b)
    assert out.shape == (N, C, H, W)
    assert jnp.allclose(out, ref, atol=1e-5, rtol=1e-5)
    assert ode_func.nfe == 1

    print("KERNEL_OK")
</pallas_src>

<mosaic_0001>
module attributes {stable_mosaic.version = 11 : i64} {
  func.func @_stnet_kernel(%arg0: i32, %arg1: i32, %arg2: memref<1x4x2x128xf32, #tpu.memory_space<vmem>>, %arg3: memref<4x4xf32, #tpu.memory_space<smem>>, %arg4: memref<4xf32, #tpu.memory_space<smem>>, %arg5: memref<1x4x2x128xf32, #tpu.memory_space<vmem>>) attributes {dimension_semantics = [#tpu.dimension_semantics<parallel>, #tpu.dimension_semantics<parallel>], iteration_bounds = array<i64: 2, 1>, scalar_prefetch = 0 : i64, scratch_operands = 0 : i64, tpu.core_type = #tpu.core_type<tc>, window_params = [{transform_indices = @transform_0, window_bounds = array<i64: 1, 4, 2, 128>}, {transform_indices = @transform_1, window_bounds = array<i64: 4, 4>}, {transform_indices = @transform_2, window_bounds = array<i64: 4>}, {transform_indices = @transform_3, window_bounds = array<i64: 1, 4, 2, 128>}]} {
    %c0 = arith.constant 0 : index
    %c0_0 = arith.constant 0 : index
    %c0_1 = arith.constant 0 : index
    %c0_2 = arith.constant 0 : index
    %0 = vector.load %arg2[%c0, %c0_0, %c0_1, %c0_2] : memref<1x4x2x128xf32, #tpu.memory_space<vmem>>, vector<1x1x2x128xf32>
    %1 = vector.shape_cast %0 : vector<1x1x2x128xf32> to vector<2x128xf32>
    %c0_3 = arith.constant 0 : index
    %c0_4 = arith.constant 0 : index
    %2 = memref.load %arg3[%c0_3, %c0_4] : memref<4x4xf32, #tpu.memory_space<smem>>
    %3 = vector.broadcast %2 : f32 to vector<2x128xf32>
    %4 = arith.mulf %1, %3 : vector<2x128xf32>
    %c0_5 = arith.constant 0 : index
    %c1 = arith.constant 1 : index
    %c0_6 = arith.constant 0 : index
    %c0_7 = arith.constant 0 : index
    %5 = vector.load %arg2[%c0_5, %c1, %c0_6, %c0_7] : memref<1x4x2x128xf32, #tpu.memory_space<vmem>>, vector<1x1x2x128xf32>
    %6 = vector.shape_cast %5 : vector<1x1x2x128xf32> to vector<2x128xf32>
    %c0_8 = arith.constant 0 : index
    %c1_9 = arith.constant 1 : index
    %7 = memref.load %arg3[%c0_8, %c1_9] : memref<4x4xf32, #tpu.memory_space<smem>>
    %8 = vector.broadcast %7 : f32 to vector<2x128xf32>
    %9 = arith.mulf %6, %8 : vector<2x128xf32>
    %10 = arith.addf %4, %9 : vector<2x128xf32>
    %c0_10 = arith.constant 0 : index
    %c2 = arith.constant 2 : index
    %c0_11 = arith.constant 0 : index
    %c0_12 = arith.constant 0 : index
    %11 = vector.load %arg2[%c0_10, %c2, %c0_11, %c0_12] : memref<1x4x2x128xf32, #tpu.memory_space<vmem>>, vector<1x1x2x128xf32>
    %12 = vector.shape_cast %11 : vector<1x1x2x128xf32> to vector<2x128xf32>
    %c0_13 = arith.constant 0 : index
    %c2_14 = arith.constant 2 : index
    %13 = memref.load %arg3[%c0_13, %c2_14] : memref<4x4xf32, #tpu.memory_space<smem>>
    %14 = vector.broadcast %13 : f32 to vector<2x128xf32>
    %15 = arith.mulf %12, %14 : vector<2x128xf32>
    %16 = arith.addf %10, %15 : vector<2x128xf32>
    %c0_15 = arith.constant 0 : index
    %c3 = arith.constant 3 : index
    %c0_16 = arith.constant 0 : index
    %c0_17 = arith.constant 0 : index
    %17 = vector.load %arg2[%c0_15, %c3, %c0_16, %c0_17] : memref<1x4x2x128xf32, #tpu.memory_space<vmem>>, vector<1x1x2x128xf32>
    %18 = vector.shape_cast %17 : vector<1x1x2x128xf32> to vector<2x128xf32>
    %c0_18 = arith.constant 0 : index
    %c3_19 = arith.constant 3 : index
    %19 = memref.load %arg3[%c0_18, %c3_19] : memref<4x4xf32, #tpu.memory_space<smem>>
    %20 = vector.broadcast %19 : f32 to vector<2x128xf32>
    %21 = arith.mulf %18, %20 : vector<2x128xf32>
    %22 = arith.addf %16, %21 : vector<2x128xf32>
    %c0_20 = arith.constant 0 : index
    %23 = memref.load %arg4[%c0_20] : memref<4xf32, #tpu.memory_space<smem>>
    %24 = vector.broadcast %23 : f32 to vector<2x128xf32>
    %25 = arith.addf %22, %24 : vector<2x128xf32>
    %26 = math.tanh %25 : vector<2x128xf32>
    %c0_21 = arith.constant 0 : index
    %c0_22 = arith.constant 0 : index
    %c0_23 = arith.constant 0 : index
    %c0_24 = arith.constant 0 : index
    %27 = vector.load %arg5[%c0_21, %c0_22, %c0_23, %c0_24] : memref<1x4x2x128xf32, #tpu.memory_space<vmem>>, vector<1x1x2x128xf32>
    %28 = vector.shape_cast %27 : vector<1x1x2x128xf32> to vector<2x128xf32>
    %29 = vector.shape_cast %26 : vector<2x128xf32> to vector<1x1x2x128xf32>
    tpu.vector_store %arg5[%c0_21, %c0_22, %c0_23, %c0_24], %29 {strides = array<i32>} : memref<1x4x2x128xf32, #tpu.memory_space<vmem>>, vector<1x1x2x128xf32>,
    %c0_25 = arith.constant 0 : index
    %c0_26 = arith.constant 0 : index
    %c0_27 = arith.constant 0 : index
    %c0_28 = arith.constant 0 : index
    %30 = vector.load %arg2[%c0_25, %c0_26, %c0_27, %c0_28] : memref<1x4x2x128xf32, #tpu.memory_space<vmem>>, vector<1x1x2x128xf32>
    %31 = vector.shape_cast %30 : vector<1x1x2x128xf32> to vector<2x128xf32>
    %c1_29 = arith.constant 1 : index
    %c0_30 = arith.constant 0 : index
    %32 = memref.load %arg3[%c1_29, %c0_30] : memref<4x4xf32, #tpu.memory_space<smem>>
    %33 = vector.broadcast %32 : f32 to vector<2x128xf32>
    %34 = arith.mulf %31, %33 : vector<2x128xf32>
    %c0_31 = arith.constant 0 : index
    %c1_32 = arith.constant 1 : index
    %c0_33 = arith.constant 0 : index
    %c0_34 = arith.constant 0 : index
    %35 = vector.load %arg2[%c0_31, %c1_32, %c0_33, %c0_34] : memref<1x4x2x128xf32, #tpu.memory_space<vmem>>, vector<1x1x2x128xf32>
    %36 = vector.shape_cast %35 : vector<1x1x2x128xf32> to vector<2x128xf32>
    %c1_35 = arith.constant 1 : index
    %c1_36 = arith.constant 1 : index
    %37 = memref.load %arg3[%c1_35, %c1_36] : memref<4x4xf32, #tpu.memory_space<smem>>
    %38 = vector.broadcast %37 : f32 to vector<2x128xf32>
    %39 = arith.mulf %36, %38 : vector<2x128xf32>
    %40 = arith.addf %34, %39 : vector<2x128xf32>
    %c0_37 = arith.constant 0 : index
    %c2_38 = arith.constant 2 : index
    %c0_39 = arith.constant 0 : index
    %c0_40 = arith.constant 0 : index
    %41 = vector.load %arg2[%c0_37, %c2_38, %c0_39, %c0_40] : memref<1x4x2x128xf32, #tpu.memory_space<vmem>>, vector<1x1x2x128xf32>
    %42 = vector.shape_cast %41 : vector<1x1x2x128xf32> to vector<2x128xf32>
    %c1_41 = arith.constant 1 : index
    %c2_42 = arith.constant 2 : index
    %43 = memref.load %arg3[%c1_41, %c2_42] : memref<4x4xf32, #tpu.memory_space<smem>>
    %44 = vector.broadcast %43 : f32 to vector<2x128xf32>
    %45 = arith.mulf %42, %44 : vector<2x128xf32>
    %46 = arith.addf %40, %45 : vector<2x128xf32>
    %c0_43 = arith.constant 0 : index
    %c3_44 = arith.constant 3 : index
    %c0_45 = arith.constant 0 : index
    %c0_46 = arith.constant 0 : index
    %47 = vector.load %arg2[%c0_43, %c3_44, %c0_45, %c0_46] : memref<1x4x2x128xf32, #tpu.memory_space<vmem>>, vector<1x1x2x128xf32>
    %48 = vector.shape_cast %47 : vector<1x1x2x128xf32> to vector<2x128xf32>
    %c1_47 = arith.constant 1 : index
    %c3_48 = arith.constant 3 : index
    %49 = memref.load %arg3[%c1_47, %c3_48] : memref<4x4xf32, #tpu.memory_space<smem>>
    %50 = vector.broadcast %49 : f32 to vector<2x128xf32>
    %51 = arith.mulf %48, %50 : vector<2x128xf32>
    %52 = arith.addf %46, %51 : vector<2x128xf32>
    %c1_49 = arith.constant 1 : index
    %53 = memref.load %arg4[%c1_49] : memref<4xf32, #tpu.memory_space<smem>>
    %54 = vector.broadcast %53 : f32 to vector<2x128xf32>
    %55 = arith.addf %52, %54 : vector<2x128xf32>
    %56 = math.tanh %55 : vector<2x128xf32>
    %c0_50 = arith.constant 0 : index
    %c1_51 = arith.constant 1 : index
    %c0_52 = arith.constant 0 : index
    %c0_53 = arith.constant 0 : index
    %57 = vector.load %arg5[%c0_50, %c1_51, %c0_52, %c0_53] : memref<1x4x2x128xf32, #tpu.memory_space<vmem>>, vector<1x1x2x128xf32>
    %58 = vector.shape_cast %57 : vector<1x1x2x128xf32> to vector<2x128xf32>
    %59 = vector.shape_cast %56 : vector<2x128xf32> to vector<1x1x2x128xf32>
    tpu.vector_store %arg5[%c0_50, %c1_51, %c0_52, %c0_53], %59 {strides = array<i32>} : memref<1x4x2x128xf32, #tpu.memory_space<vmem>>, vector<1x1x2x128xf32>,
    %c0_54 = arith.constant 0 : index
    %c0_55 = arith.constant 0 : index
    %c0_56 = arith.constant 0 : index
    %c0_57 = arith.constant 0 : index
    %60 = vector.load %arg2[%c0_54, %c0_55, %c0_56, %c0_57] : memref<1x4x2x128xf32, #tpu.memory_space<vmem>>, vector<1x1x2x128xf32>
    %61 = vector.shape_cast %60 : vector<1x1x2x128xf32> to vector<2x128xf32>
    %c2_58 = arith.constant 2 : index
    %c0_59 = arith.constant 0 : index
    %62 = memref.load %arg3[%c2_58, %c0_59] : memref<4x4xf32, #tpu.memory_space<smem>>
    %63 = vector.broadcast %62 : f32 to vector<2x128xf32>
    %64 = arith.mulf %61, %63 : vector<2x128xf32>
    %c0_60 = arith.constant 0 : index
    %c1_61 = arith.constant 1 : index
    %c0_62 = arith.constant 0 : index
    %c0_63 = arith.constant 0 : index
    %65 = vector.load %arg2[%c0_60, %c1_61, %c0_62, %c0_63] : memref<1x4x2x128xf32, #tpu.memory_space<vmem>>, vector<1x1x2x128xf32>
    %66 = vector.shape_cast %65 : vector<1x1x2x128xf32> to vector<2x128xf32>
    %c2_64 = arith.constant 2 : index
    %c1_65 = arith.constant 1 : index
    %67 = memref.load %arg3[%c2_64, %c1_65] : memref<4x4xf32, #tpu.memory_space<smem>>
    %68 = vector.broadcast %67 : f32 to vector<2x128xf32>
    %69 = arith.mulf %66, %68 : vector<2x128xf32>
    %70 = arith.addf %64, %69 : vector<2x128xf32>
    %c0_66 = arith.constant 0 : index
    %c2_67 = arith.constant 2 : index
    %c0_68 = arith.constant 0 : index
    %c0_69 = arith.constant 0 : index
    %71 = vector.load %arg2[%c0_66, %c2_67, %c0_68, %c0_69] : memref<1x4x2x128xf32, #tpu.memory_space<vmem>>, vector<1x1x2x128xf32>
    %72 = vector.shape_cast %71 : vector<1x1x2x128xf32> to vector<2x128xf32>
    %c2_70 = arith.constant 2 : index
    %c2_71 = arith.constant 2 : index
    %73 = memref.load %arg3[%c2_70, %c2_71] : memref<4x4xf32, #tpu.memory_space<smem>>
    %74 = vector.broadcast %73 : f32 to vector<2x128xf32>
    %75 = arith.mulf %72, %74 : vector<2x128xf32>
    %76 = arith.addf %70, %75 : vector<2x128xf32>
    %c0_72 = arith.constant 0 : index
    %c3_73 = arith.constant 3 : index
    %c0_74 = arith.constant 0 : index
    %c0_75 = arith.constant 0 : index
    %77 = vector.load %arg2[%c0_72, %c3_73, %c0_74, %c0_75] : memref<1x4x2x128xf32, #tpu.memory_space<vmem>>, vector<1x1x2x128xf32>
    %78 = vector.shape_cast %77 : vector<1x1x2x128xf32> to vector<2x128xf32>
    %c2_76 = arith.constant 2 : index
    %c3_77 = arith.constant 3 : index
    %79 = memref.load %arg3[%c2_76, %c3_77] : memref<4x4xf32, #tpu.memory_space<smem>>
    %80 = vector.broadcast %79 : f32 to vector<2x128xf32>
    %81 = arith.mulf %78, %80 : vector<2x128xf32>
    %82 = arith.addf %76, %81 : vector<2x128xf32>
    %c2_78 = arith.constant 2 : index
    %83 = memref.load %arg4[%c2_78] : memref<4xf32, #tpu.memory_space<smem>>
    %84 = vector.broadcast %83 : f32 to vector<2x128xf32>
    %85 = arith.addf %82, %84 : vector<2x128xf32>
    %86 = math.tanh %85 : vector<2x128xf32>
    %c0_79 = arith.constant 0 : index
    %c2_80 = arith.constant 2 : index
    %c0_81 = arith.constant 0 : index
    %c0_82 = arith.constant 0 : index
    %87 = vector.load %arg5[%c0_79, %c2_80, %c0_81, %c0_82] : memref<1x4x2x128xf32, #tpu.memory_space<vmem>>, vector<1x1x2x128xf32>
    %88 = vector.shape_cast %87 : vector<1x1x2x128xf32> to vector<2x128xf32>
    %89 = vector.shape_cast %86 : vector<2x128xf32> to vector<1x1x2x128xf32>
    tpu.vector_store %arg5[%c0_79, %c2_80, %c0_81, %c0_82], %89 {strides = array<i32>} : memref<1x4x2x128xf32, #tpu.memory_space<vmem>>, vector<1x1x2x128xf32>,
    %c0_83 = arith.constant 0 : index
    %c0_84 = arith.constant 0 : index
    %c0_85 = arith.constant 0 : index
    %c0_86 = arith.constant 0 : index
    %90 = vector.load %arg2[%c0_83, %c0_84, %c0_85, %c0_86] : memref<1x4x2x128xf32, #tpu.memory_space<vmem>>, vector<1x1x2x128xf32>
    %91 = vector.shape_cast %90 : vector<1x1x2x128xf32> to vector<2x128xf32>
    %c3_87 = arith.constant 3 : index
    %c0_88 = arith.constant 0 : index
    %92 = memref.load %arg3[%c3_87, %c0_88] : memref<4x4xf32, #tpu.memory_space<smem>>
    %93 = vector.broadcast %92 : f32 to vector<2x128xf32>
    %94 = arith.mulf %91, %93 : vector<2x128xf32>
    %c0_89 = arith.constant 0 : index
    %c1_90 = arith.constant 1 : index
    %c0_91 = arith.constant 0 : index
    %c0_92 = arith.constant 0 : index
    %95 = vector.load %arg2[%c0_89, %c1_90, %c0_91, %c0_92] : memref<1x4x2x128xf32, #tpu.memory_space<vmem>>, vector<1x1x2x128xf32>
    %96 = vector.shape_cast %95 : vector<1x1x2x128xf32> to vector<2x128xf32>
    %c3_93 = arith.constant 3 : index
    %c1_94 = arith.constant 1 : index
    %97 = memref.load %arg3[%c3_93, %c1_94] : memref<4x4xf32, #tpu.memory_space<smem>>
    %98 = vector.broadcast %97 : f32 to vector<2x128xf32>
    %99 = arith.mulf %96, %98 : vector<2x128xf32>
    %100 = arith.addf %94, %99 : vector<2x128xf32>
    %c0_95 = arith.constant 0 : index
    %c2_96 = arith.constant 2 : index
    %c0_97 = arith.constant 0 : index
    %c0_98 = arith.constant 0 : index
    %101 = vector.load %arg2[%c0_95, %c2_96, %c0_97, %c0_98] : memref<1x4x2x128xf32, #tpu.memory_space<vmem>>, vector<1x1x2x128xf32>
    %102 = vector.shape_cast %101 : vector<1x1x2x128xf32> to vector<2x128xf32>
    %c3_99 = arith.constant 3 : index
    %c2_100 = arith.constant 2 : index
    %103 = memref.load %arg3[%c3_99, %c2_100] : memref<4x4xf32, #tpu.memory_space<smem>>
    %104 = vector.broadcast %103 : f32 to vector<2x128xf32>
    %105 = arith.mulf %102, %104 : vector<2x128xf32>
    %106 = arith.addf %100, %105 : vector<2x128xf32>
    %c0_101 = arith.constant 0 : index
    %c3_102 = arith.constant 3 : index
    %c0_103 = arith.constant 0 : index
    %c0_104 = arith.constant 0 : index
    %107 = vector.load %arg2[%c0_101, %c3_102, %c0_103, %c0_104] : memref<1x4x2x128xf32, #tpu.memory_space<vmem>>, vector<1x1x2x128xf32>
    %108 = vector.shape_cast %107 : vector<1x1x2x128xf32> to vector<2x128xf32>
    %c3_105 = arith.constant 3 : index
    %c3_106 = arith.constant 3 : index
    %109 = memref.load %arg3[%c3_105, %c3_106] : memref<4x4xf32, #tpu.memory_space<smem>>
    %110 = vector.broadcast %109 : f32 to vector<2x128xf32>
    %111 = arith.mulf %108, %110 : vector<2x128xf32>
    %112 = arith.addf %106, %111 : vector<2x128xf32>
    %c3_107 = arith.constant 3 : index
    %113 = memref.load %arg4[%c3_107] : memref<4xf32, #tpu.memory_space<smem>>
    %114 = vector.broadcast %113 : f32 to vector<2x128xf32>
    %115 = arith.addf %112, %114 : vector<2x128xf32>
    %116 = math.tanh %115 : vector<2x128xf32>
    %c0_108 = arith.constant 0 : index
    %c3_109 = arith.constant 3 : index
    %c0_110 = arith.constant 0 : index
    %c0_111 = arith.constant 0 : index
    %117 = vector.load %arg5[%c0_108, %c3_109, %c0_110, %c0_111] : memref<1x4x2x128xf32, #tpu.memory_space<vmem>>, vector<1x1x2x128xf32>
    %118 = vector.shape_cast %117 : vector<1x1x2x128xf32> to vector<2x128xf32>
    %119 = vector.shape_cast %116 : vector<2x128xf32> to vector<1x1x2x128xf32>
    tpu.vector_store %arg5[%c0_108, %c3_109, %c0_110, %c0_111], %119 {strides = array<i32>} : memref<1x4x2x128xf32, #tpu.memory_space<vmem>>, vector<1x1x2x128xf32>,
    return
  }
  func.func @transform_0(%arg0: i32, %arg1: i32) -> (i32, i32, i32, i32) {
    %c0_i32 = arith.constant 0 : i32
    %c0_i32_0 = arith.constant 0 : i32
    %c0_i32_1 = arith.constant 0 : i32
    return %arg0, %c0_i32, %arg1, %c0_i32_0 : i32, i32, i32, i32
  }
  func.func @transform_1(%arg0: i32, %arg1: i32) -> (i32, i32) {
    %c0_i32 = arith.constant 0 : i32
    %c0_i32_0 = arith.constant 0 : i32
    %c0_i32_1 = arith.constant 0 : i32
    return %c0_i32, %c0_i32_0 : i32, i32
  }
  func.func @transform_2(%arg0: i32, %arg1: i32) -> i32 {
    %c0_i32 = arith.constant 0 : i32
    %c0_i32_0 = arith.constant 0 : i32
    return %c0_i32 : i32
  }
  func.func @transform_3(%arg0: i32, %arg1: i32) -> (i32, i32, i32, i32) {
    %c0_i32 = arith.constant 0 : i32
    %c0_i32_0 = arith.constant 0 : i32
    %c0_i32_1 = arith.constant 0 : i32
    return %arg0, %c0_i32, %arg1, %c0_i32_0 : i32, i32, i32, i32
  }
}

</mosaic_0001>

<llo_original>
// kernel: tpu_custom_call.1
$region0: #{tpu_custom_call.1}
  #allocation0 [shape = 'u32[]', space=smem, size = 0x4, offset = 0x4, fixed_abs, tag = 'smem constant byte address 0x4 - core index']
  #allocation1 [shape = 'u32[72,128]{1,0:T(1,128)}', space=vmem, size = 0x9000, scoped, tag = 'internal scratch']
  %s0 = inlined_call_operand.hbm [shape: f32[2,4,2,128], index: 0, kind: input, shape index: {}]
  %s1 = inlined_call_operand.hbm [shape: f32[4,4], index: 1, kind: input, shape index: {}]
  %s2 = inlined_call_operand.vmem [shape: f32[4], index: 2, kind: input, shape index: {}]
  %s3 = inlined_call_operand.hbm [shape: f32[2,4,2,128], index: 3, kind: output, shape index: {}]
  %s4 = sld [smem:[#allocation0]]
  $region57: #{tpu_custom_call.1} parent=0
    _
  %s6 = ssub.s32 1, %s4
  %s7 = scalar_select 0, %s6, %s4
  $region1: #{tpu_custom_call.1} parent=0
    #allocation2 [shape = 'u8[8192]{0}', space=vmem, size = 0x2000, scoped, tag = 'input window, operand 0']
    #allocation3 [shape = 's32[2]{0}', space=sflag, size = 0x8, scoped, tag = 'scoped memory for tpu_custom_call.1']
    #allocation4 [shape = 's32[2]{0}', space=sflag, size = 0x8, scoped, tag = 'scoped memory for tpu_custom_call.1']
    #allocation5 [shape = 's32[2]{0}', space=sflag, size = 0x8, scoped, tag = 'scoped memory for tpu_custom_call.1']
    #allocation6 [shape = 's32[2]{0}', space=sflag, size = 0x8, scoped, tag = 'scoped memory for tpu_custom_call.1']
    #allocation7 [shape = 'u8[2048]{0}', space=smem, size = 0x800, scoped, tag = 'input window, operand 1, single buffered']
    #allocation8 [shape = 'u8[512]{0}', space=smem, size = 0x200, scoped, tag = 'input window, operand 2, single buffered']
    #allocation9 [shape = 'u8[8192]{0}', space=vmem, size = 0x2000, scoped, tag = 'output window, operand 0']
    %8 = vsyncpa [#allocation3], 0
    %s9 = scalar_lea.sflag [#allocation3], 1
    %10 = vsyncpa %s9, 0
    %11 = vsyncpa [#allocation5], 0
    %12 = vsyncpa [#allocation6], 0
    %13 = vsyncpa [#allocation4], 0
    %s14 = scalar_lea.sflag [#allocation4], 1
    %15 = vsyncpa %s14, 0
    loop: start=0, step=1, limit=4
    $region2: #{tpu_custom_call.1} parent=1 // loop_pre_header
      _
    $region3: #{tpu_custom_call.1} parent=1 // loop_header
      %s17 = sphi 0, %s21
      %p18 = scmp.ge.s32.totalorder %s17, 4
      %s24 = sphi 0, %s36
      %s25 = sphi 0, %s32
      %s26 = sphi 0, %s24
      %s27 = sphi 0, %s25
      %s28 = sphi 0, %s26
      %s29 = sphi 0, %s27
      %s41 = sphi 0, %s43
      %s44 = sphi 0, %s41
      %s45 = sphi 0, %s44
      %s61 = sphi 0, %s45
      %s65 = sphi 0, %s65
      %s67 = sphi 0, %s65
      %s68 = sphi 0, %s67
      %s82 = sphi 0, %s68
      %s86 = sphi 0, %s86
      %s88 = sphi 0, %s86
      %s89 = sphi 0, %s88
      %s103 = sphi 0, %s89
      %s111 = sphi 0, %s113
      %s114 = sphi 0, %s111
      %s115 = sphi 0, %s114
      %s131 = sphi 0, %s115
    $region4: #{tpu_custom_call.1} parent=1 // loop_header_branch
      %20 = sbr.rel (%p18) target = $region8
    $region5: #{tpu_custom_call.1} parent=1 // loop_body
      %s22 = ssub.s32 %s17, 1
      %s23 = ssub.s32 %s17, 2
      %s30 = sadd.s32 1, %s25
      %p31 = scmp.ge.s32.totalorder %s30, 1
      %s32 = scalar_select %p31, 0, %s30
      %s33 = sadd.s32 1, %s24
      %s34 = scalar_select %p31, %s33, %s24
      %p35 = scmp.ge.s32.totalorder %s34, 2
      %s36 = scalar_select %p35, 0, %s34
      %s37 = ssub.s32 %s24, %s36
      %s38 = ssub.s32 %s25, %s32
      %s39 = sor.u32 %s37, %s38
      %p40 = scmp.eq.s32.totalorder %s39, 0
      %s42 = sadd.s32 %s41, 1
      %s43 = scalar_select %p40, %s41, %s42
      %p46 = pneg %p40
      %p47 = scmp.eq.s32.totalorder %s17, 1
      %p48 = por %p46, %p47
      %p49 = scmp.ne.s32.totalorder %s41, %s44
      %p50 = scmp.eq.s32.totalorder %s17, 0
      %p51 = por %p49, %p50
      %p52 = scmp.ne.s32.totalorder %s41, %s44
      %p53 = scmp.eq.s32.totalorder %s22, 1
      %p54 = por %p52, %p53
      %p55 = scmp.ne.s32.totalorder %s44, %s45
      %p56 = scmp.eq.s32.totalorder %s22, 0
      %p57 = por %p55, %p56
      %p58 = scmp.ne.s32.totalorder %s44, %s45
      %p59 = scmp.eq.s32.totalorder %s23, 1
      %p60 = por %p58, %p59
      %p62 = scmp.ne.s32.totalorder %s45, %s61
      %p63 = scmp.eq.s32.totalorder %s23, 0
      %p64 = por %p62, %p63
      %s66 = sadd.s32 %s65, 1
      %p69 = scmp.eq.s32.totalorder %s17, 1
      %p70 = scmp.ne.s32.totalorder %s65, %s67
      %p71 = scmp.eq.s32.totalorder %s17, 0
      %p72 = por %p70, %p71
      %p73 = scmp.ne.s32.totalorder %s65, %s67
      %p74 = scmp.eq.s32.totalorder %s22, 1
      %p75 = por %p73, %p74
      %p76 = scmp.ne.s32.totalorder %s67, %s68
      %p77 = scmp.eq.s32.totalorder %s22, 0
      %p78 = por %p76, %p77
      %p79 = scmp.ne.s32.totalorder %s67, %s68
      %p80 = scmp.eq.s32.totalorder %s23, 1
      %p81 = por %p79, %p80
      %p83 = scmp.ne.s32.totalorder %s68, %s82
      %p84 = scmp.eq.s32.totalorder %s23, 0
      %p85 = por %p83, %p84
      %s87 = sadd.s32 %s86, 1
      %p90 = scmp.eq.s32.totalorder %s17, 1
      %p91 = scmp.ne.s32.totalorder %s86, %s88
      %p92 = scmp.eq.s32.totalorder %s17, 0
      %p93 = por %p91, %p92
      %p94 = scmp.ne.s32.totalorder %s86, %s88
      %p95 = scmp.eq.s32.totalorder %s22, 1
      %p96 = por %p94, %p95
      %p97 = scmp.ne.s32.totalorder %s88, %s89
      %p98 = scmp.eq.s32.totalorder %s22, 0
      %p99 = por %p97, %p98
      %p100 = scmp.ne.s32.totalorder %s88, %s89
      %p101 = scmp.eq.s32.totalorder %s23, 1
      %p102 = por %p100, %p101
      %p104 = scmp.ne.s32.totalorder %s89, %s103
      %p105 = scmp.eq.s32.totalorder %s23, 0
      %p106 = por %p104, %p105
      %s107 = ssub.s32 %s24, %s36
      %s108 = ssub.s32 %s25, %s32
      %s109 = sor.u32 %s107, %s108
      %p110 = scmp.eq.s32.totalorder %s109, 0
      %s112 = sadd.s32 %s111, 1
      %s113 = scalar_select %p110, %s111, %s112
      %p116 = pneg %p110
      %p117 = scmp.eq.s32.totalorder %s17, 1
      %p118 = por %p116, %p117
      %p119 = scmp.ne.s32.totalorder %s111, %s114
      %p120 = scmp.eq.s32.totalorder %s17, 0
      %p121 = por %p119, %p120
      %p122 = scmp.ne.s32.totalorder %s111, %s114
      %p123 = scmp.eq.s32.totalorder %s22, 1
      %p124 = por %p122, %p123
      %p125 = scmp.ne.s32.totalorder %s114, %s115
      %p126 = scmp.eq.s32.totalorder %s22, 0
      %p127 = por %p125, %p126
      %p128 = scmp.ne.s32.totalorder %s114, %s115
      %p129 = scmp.eq.s32.totalorder %s23, 1
      %p130 = por %p128, %p129
      %p132 = scmp.ne.s32.totalorder %s115, %s131
      %p133 = scmp.eq.s32.totalorder %s23, 0
      %p134 = por %p132, %p133
      %p135 = scmp.le.s32.totalorder 1, %s17
      %p136 = scmp.lt.s32.totalorder %s17, 3
      %p137 = pnand %p135, %p136
      %p138 = pneg %p137
      // Predicated region
      $region9: #{tpu_custom_call.1} parent=5 // pred_check
        _
      $region10: #{tpu_custom_call.1} parent=5 // pred_check_branch
        %140 = sbr.rel (%p137) target = $region12
      $region11: #{tpu_custom_call.1} parent=5 // pred_region
        %s141 = ssub.s32 %s17, 1
        // Predicated region
        $region13: #{tpu_custom_call.1} parent=11 // pred_check
          %p142 = pneg %p78
        $region14: #{tpu_custom_call.1} parent=11 // pred_check_branch
          %144 = sbr.rel (%p142) target = $region16
        $region15: #{tpu_custom_call.1} parent=11 // pred_region
          %146 = vsyncadd [#allocation5], 0
          %s148 = sshll.u32 %s1, 4
          %s149 = int_to_ptr.hbm [resolvable:$true] %s148
          %151 = dma.hbm_to_smem %s149, 64, [#allocation7], [#allocation5]
        $region16: #{tpu_custom_call.1} parent=11 // pred_fallthru
          _
        // Predicated region
        $region17: #{tpu_custom_call.1} parent=11 // pred_check
          %p152 = pneg %p99
        $region18: #{tpu_custom_call.1} parent=11 // pred_check_branch
          %154 = sbr.rel (%p152) target = $region20
        $region19: #{tpu_custom_call.1} parent=11 // pred_region
          %156 = vsyncadd [#allocation6], 0
          %s158 = sshll.u32 %s2, 4
          %s159 = int_to_ptr.vmem [resolvable:$true] %s158
          %161 = dma.vmem_to_smem %s159, 16, [#allocation8], [#allocation6]
        $region20: #{tpu_custom_call.1} parent=11 // pred_fallthru
          _
      $region12: #{tpu_custom_call.1} parent=5 // pred_fallthru
        _
      %p162 = scmp.lt.s32.totalorder %s17, 2
      // Predicated region
      $region21: #{tpu_custom_call.1} parent=5 // pred_check
        %p163 = pneg %p162
      $region22: #{tpu_custom_call.1} parent=5 // pred_check_branch
        %165 = sbr.rel (%p163) target = $region24
      $region23: #{tpu_custom_call.1} parent=5 // pred_region
        // Predicated region
        $region25: #{tpu_custom_call.1} parent=23 // pred_check
          %p166 = pneg %p51
        $region26: #{tpu_custom_call.1} parent=23 // pred_check_branch
          %168 = sbr.rel (%p166) target = $region28
        $region27: #{tpu_custom_call.1} parent=23 // pred_region
          %s169 = sand.u32 %s41, 1
          %s170 = scalar_lea.sflag [#allocation3], %s169
          %s171 = sand.u32 %s41, 1
          %s172 = smul.addr %s171, 8
          %s173 = scalar_lea.vmem [#allocation2], %s172
          %175 = vsyncadd %s170, 0
          %s176 = smul.addr %s24, 4
          %s177 = sadd.s32 %s25, %s176
          %s178 = smul.addr %s177, 2
          %s179 = scalar_lea.hbm %s0, %s178
          %s180 = sshll.u32 %s179, 4
          %s181 = int_to_ptr.hbm [resolvable:$true] %s180
          %s182 = sshll.u32 %s173, 4
          %s183 = int_to_ptr.vmem [resolvable:$true] %s182
          %188 = dma.hbm_to_vmem [thread:$0]  %s181, 128, %s183, %s170, 32, 32, 2
        $region28: #{tpu_custom_call.1} parent=23 // pred_fallthru
          _
      $region24: #{tpu_custom_call.1} parent=5 // pred_fallthru
        _
      %p189 = scmp.le.s32.totalorder 1, %s17
      %p190 = scmp.lt.s32.totalorder %s17, 3
      %p191 = pnand %p189, %p190
      %p192 = pneg %p191
      // Predicated region
      $region29: #{tpu_custom_call.1} parent=5 // pred_check
        _
      $region30: #{tpu_custom_call.1} parent=5 // pred_check_branch
        %194 = sbr.rel (%p191) target = $region32
      $region31: #{tpu_custom_call.1} parent=5 // pred_region
        %s195 = ssub.s32 %s17, 1
        %s196 = sand.u32 %s44, 1
        %s197 = scalar_lea.sflag [#allocation3], %s196
        %s198 = sand.u32 %s44, 1
        %s199 = smul.addr %s198, 8
        %s200 = scalar_lea.vmem [#allocation2], %s199
        // Predicated region
        $region33: #{tpu_custom_call.1} parent=31 // pred_check
          %p201 = pneg %p57
        $region34: #{tpu_custom_call.1} parent=31 // pred_check_branch
          %203 = sbr.rel (%p201) target = $region36
        $region35: #{tpu_custom_call.1} parent=31 // pred_region
          %205 = dma.done %s197, 128
        $region36: #{tpu_custom_call.1} parent=31 // pred_fallthru
          _
        // Predicated region
        $region37: #{tpu_custom_call.1} parent=31 // pred_check
          %p206 = pneg %p78
        $region38: #{tpu_custom_call.1} parent=31 // pred_check_branch
          %208 = sbr.rel (%p206) target = $region40
        $region39: #{tpu_custom_call.1} parent=31 // pred_region
          %210 = dma.done [#allocation5], 64
        $region40: #{tpu_custom_call.1} parent=31 // pred_fallthru
          _
        // Predicated region
        $region41: #{tpu_custom_call.1} parent=31 // pred_check
          %p211 = pneg %p99
        $region42: #{tpu_custom_call.1} parent=31 // pred_check_branch
          %213 = sbr.rel (%p211) target = $region44
        $region43: #{tpu_custom_call.1} parent=31 // pred_region
          %215 = dma.done [#allocation6], 16
        $region44: #{tpu_custom_call.1} parent=31 // pred_fallthru
          _
        %216 = sfence
        %s217 = sand.u32 %s44, 1
        %s218 = scalar_lea.sflag [#allocation3], %s217
        %s219 = sand.u32 %s44, 1
        %s220 = smul.addr %s219, 8
        %s221 = scalar_lea.vmem [#allocation2], %s220
        %p222 = pneg %p57
        %p223 = pneg %p54
        %p224 = pneg %p78
        %p225 = pneg %p75
        %p226 = pneg %p99
        %p227 = pneg %p96
        %p228 = pneg %p127
        %p229 = pneg %p124
        %s230 = sand.u32 %s114, 1
        %s231 = scalar_lea.sflag [#allocation4], %s230
        %s232 = sand.u32 %s114, 1
        %s233 = smul.addr %s232, 8
        %s234 = scalar_lea.vmem [#allocation9], %s233
        %v235 = vld [vmem:[%s200] sm:$0x3]
        %s236 = sld [smem:[#allocation7]]
        %v237 = vstv %s236
        %v238 = vmul.f32 %v235, %v237
        %s239 = scalar_lea.vmem %s200, 2 [#allocation2]
        %v240 = vld [vmem:[%s239] sm:$0x3]
        %s241 = sld [smem:[#allocation7 + $0x1]]
        %v242 = vstv %s241
        %v243 = vmul.f32 %v240, %v242
        %v244 = vadd.f32 %v238, %v243
        %s245 = scalar_lea.vmem %s200, 4 [#allocation2]
        %v246 = vld [vmem:[%s245] sm:$0x3]
        %s247 = sld [smem:[#allocation7 + $0x2]]
        %v248 = vstv %s247
        %v249 = vmul.f32 %v246, %v248
        %v250 = vadd.f32 %v244, %v249
        %s251 = scalar_lea.vmem %s200, 6 [#allocation2]
        %v252 = vld [vmem:[%s251] sm:$0x3]
        %s253 = sld [smem:[#allocation7 + $0x3]]
        %v254 = vstv %s253
        %v255 = vmul.f32 %v252, %v254
        %v256 = vadd.f32 %v250, %v255
        %s257 = sld [smem:[#allocation8]]
        %v258 = vstv %s257
        %v259 = vadd.f32 %v256, %v258
        %v260 = vtanh.pop %v259
        %261 = vst [vmem:[%s234] sm:$0x3] %v260
        %v262 = vld [vmem:[%s200] sm:$0x3]
        %s263 = sld [smem:[#allocation7 + $0x80]]
        %v264 = vstv %s263
        %v265 = vmul.f32 %v262, %v264
        %v266 = vld [vmem:[%s239] sm:$0x3]
        %s267 = sld [smem:[#allocation7 + $0x81]]
        %v268 = vstv %s267
        %v269 = vmul.f32 %v266, %v268
        %v270 = vadd.f32 %v265, %v269
        %v271 = vld [vmem:[%s245] sm:$0x3]
        %s272 = sld [smem:[#allocation7 + $0x82]]
        %v273 = vstv %s272
        %v274 = vmul.f32 %v271, %v273
        %v275 = vadd.f32 %v270, %v274
        %v276 = vld [vmem:[%s251] sm:$0x3]
        %s277 = sld [smem:[#allocation7 + $0x83]]
        %v278 = vstv %s277
        %v279 = vmul.f32 %v276, %v278
        %v280 = vadd.f32 %v275, %v279
        %s281 = sld [smem:[#allocation8 + $0x1]]
        %v282 = vstv %s281
        %v283 = vadd.f32 %v280, %v282
        %v284 = vtanh.pop %v283
        %s285 = scalar_lea.vmem %s234, 2 [#allocation9]
        %286 = vst [vmem:[%s285] sm:$0x3] %v284
        %v287 = vld [vmem:[%s200] sm:$0x3]
        %s288 = sld [smem:[#allocation7 + $0x100]]
        %v289 = vstv %s288
        %v290 = vmul.f32 %v287, %v289
        %v291 = vld [vmem:[%s239] sm:$0x3]
        %s292 = sld [smem:[#allocation7 + $0x101]]
        %v293 = vstv %s292
        %v294 = vmul.f32 %v291, %v293
        %v295 = vadd.f32 %v290, %v294
        %v296 = vld [vmem:[%s245] sm:$0x3]
        %s297 = sld [smem:[#allocation7 + $0x102]]
        %v298 = vstv %s297
        %v299 = vmul.f32 %v296, %v298
        %v300 = vadd.f32 %v295, %v299
        %v301 = vld [vmem:[%s251] sm:$0x3]
        %s302 = sld [smem:[#allocation7 + $0x103]]
        %v303 = vstv %s302
        %v304 = vmul.f32 %v301, %v303
        %v305 = vadd.f32 %v300, %v304
        %s306 = sld [smem:[#allocation8 + $0x2]]
        %v307 = vstv %s306
        %v308 = vadd.f32 %v305, %v307
        %v309 = vtanh.pop %v308
        %s310 = scalar_lea.vmem %s234, 4 [#allocation9]
        %311 = vst [vmem:[%s310] sm:$0x3] %v309
        %v312 = vld [vmem:[%s200] sm:$0x3]
        %s313 = sld [smem:[#allocation7 + $0x180]]
        %v314 = vstv %s313
        %v315 = vmul.f32 %v312, %v314
        %v316 = vld [vmem:[%s239] sm:$0x3]
        %s317 = sld [smem:[#allocation7 + $0x181]]
        %v318 = vstv %s317
        %v319 = vmul.f32 %v316, %v318
        %v320 = vadd.f32 %v315, %v319
        %v321 = vld [vmem:[%s245] sm:$0x3]
        %s322 = sld [smem:[#allocation7 + $0x182]]
        %v323 = vstv %s322
        %v324 = vmul.f32 %v321, %v323
        %v325 = vadd.f32 %v320, %v324
        %v326 = vld [vmem:[%s251] sm:$0x3]
        %s327 = sld [smem:[#allocation7 + $0x183]]
        %v328 = vstv %s327
        %v329 = vmul.f32 %v326, %v328
        %v330 = vadd.f32 %v325, %v329
        %s331 = sld [smem:[#allocation8 + $0x3]]
        %v332 = vstv %s331
        %v333 = vadd.f32 %v330, %v332
        %v334 = vtanh.pop %v333
        %s335 = scalar_lea.vmem %s234, 6 [#allocation9]
        %336 = vst [vmem:[%s335] sm:$0x3] %v334
        %s337 = sand.u32 %s114, 1
        %s338 = scalar_lea.sflag [#allocation4], %s337
        %s339 = sand.u32 %s114, 1
        %s340 = smul.addr %s339, 8
        %s341 = scalar_lea.vmem [#allocation9], %s340
        // Predicated region
        $region45: #{tpu_custom_call.1} parent=31 // pred_check
          %p342 = pneg %p124
        $region46: #{tpu_custom_call.1} parent=31 // pred_check_branch
          %344 = sbr.rel (%p342) target = $region48
        $region47: #{tpu_custom_call.1} parent=31 // pred_region
          %346 = vsyncadd %s338, 0
          %s347 = smul.addr %s26, 4
          %s348 = sadd.s32 %s27, %s347
          %s349 = smul.addr %s348, 2
          %s350 = scalar_lea.hbm %s3, %s349
          %s351 = sshll.u32 %s341, 4
          %s352 = int_to_ptr.vmem [resolvable:$true] %s351
          %s353 = sshll.u32 %s350, 4
          %s354 = int_to_ptr.hbm [resolvable:$true] %s353
          %359 = dma.vmem_to_hbm [thread:$0]  %s352, 128, %s354, %s338, 32, 32, 2
        $region48: #{tpu_custom_call.1} parent=31 // pred_fallthru
          _
      $region32: #{tpu_custom_call.1} parent=5 // pred_fallthru
        _
      %p360 = scmp.le.s32.totalorder 2, %s17
      // Predicated region
      $region49: #{tpu_custom_call.1} parent=5 // pred_check
        %p361 = pneg %p360
      $region50: #{tpu_custom_call.1} parent=5 // pred_check_branch
        %363 = sbr.rel (%p361) target = $region52
      $region51: #{tpu_custom_call.1} parent=5 // pred_region
        %s364 = ssub.s32 %s17, 2
        // Predicated region
        $region53: #{tpu_custom_call.1} parent=51 // pred_check
          %p365 = pneg %p130
        $region54: #{tpu_custom_call.1} parent=51 // pred_check_branch
          %367 = sbr.rel (%p365) target = $region56
        $region55: #{tpu_custom_call.1} parent=51 // pred_region
          %s368 = sand.u32 %s115, 1
          %s369 = scalar_lea.sflag [#allocation4], %s368
          %s370 = sand.u32 %s115, 1
          %s371 = smul.addr %s370, 8
          %s372 = scalar_lea.vmem [#allocation9], %s371
          %374 = dma.done %s369, 128
        $region56: #{tpu_custom_call.1} parent=51 // pred_fallthru
          _
      $region52: #{tpu_custom_call.1} parent=5 // pred_fallthru
        _
    $region6: #{tpu_custom_call.1} parent=1 // loop_footer
      %s21 = sadd.s32 1, %s17
    $region7: #{tpu_custom_call.1} parent=1 // loop_footer_branch
      %16 = sbr.rel target = $region3
    $region8: #{tpu_custom_call.1} parent=1 // loop_exit
      _
    %375 = vsyncpa [#allocation3], 1
    %s376 = scalar_lea.sflag [#allocation3], 1
    %377 = vsyncpa %s376, 1
    %378 = vsyncpa [#allocation4], 1
    %s379 = scalar_lea.sflag [#allocation4], 1
    %380 = vsyncpa %s379, 1
    %381 = vsyncpa [#allocation5], 1
    %s382 = scalar_lea.sflag [#allocation5], 1
    %383 = vsyncpa %s382, 1
    %384 = vsyncpa [#allocation6], 1
    %s385 = scalar_lea.sflag [#allocation6], 1
    %386 = vsyncpa %s385, 1

</llo_original>
